<compile_context>
chip_gen: v5e
topology: v5e:2x2
jax: 0.10.0
libtpu: 0.0.40
codegen_flags: <defaults>
</compile_context>

<pallas_src>
import numpy as np
import jax
import jax.numpy as jnp
from jax.experimental import pallas as pl
from jax.experimental.pallas import tpu as pltpu


def _gaussian_kernel_1d(ksize: int, sigma: float) -> np.ndarray:
    # Matches cv2.getGaussianKernel(ksize, sigma) for sigma > 0 (normalized 1-D
    # Gaussian); the module's 2-D kernel is its outer product (separable).
    ax = np.arange(ksize, dtype=np.float64) - (ksize - 1) / 2.0
    g = np.exp(-(ax ** 2) / (2.0 * sigma ** 2))
    g /= g.sum()
    return g.astype(np.float32)


def _round_up(n: int, m: int) -> int:
    return (n + m - 1) // m * m


def _vmem_capacity_bytes() -> int:
    # Generation-aware sizing (v7x: 64 MiB, v5e/v6e: 128 MiB).  Fall back to the
    # smallest (v7x) capacity if the query is unavailable.
    try:
        return int(pltpu.get_tpu_info().vmem_capacity_bytes)
    except Exception:
        return 64 << 20


def _pick_c_tile(B: int, C: int, plane_bytes: int, budget_bytes: int) -> int:
    """Largest channel-tile divisor of C whose working set fits the budget.

    Working set per grid step ~ (7*c_tile + 8) planes: 2x double-buffered input
    block + 2x output block + ~3 live full-tile temporaries, plus the small
    single-channel mask planes.  Keep >= 2 total grid steps so both v7x
    TensorCores get work; when B >= 2 the batch grid axis already provides
    them, so c_tile == C is allowed.
    """
    best = 1
    for d in range(1, C + 1):
        if C % d:
            continue
        if (7 * d + 8) * plane_bytes > budget_bytes:
            continue
        if d == C and C > 1 and B < 2:
            continue
        best = d
    return best


def make_laplacian_pyramid(B, C, H, W, pyramid_levels=3, c_tile=None):
    """Returns (callable(x: (B,C,H,W) f32) -> (B,C,H,W) f32, kernels2d)."""
    assert pyramid_levels >= 2
    sigma = 1.6
    s_value = 2.0 ** (1.0 / 3.0)
    ksizes = [2 * i + 3 for i in range(pyramid_levels)]
    g1ds = [_gaussian_kernel_1d(ksizes[i], sigma * (s_value ** i))
            for i in range(pyramid_levels)]
    kernels2d = [np.outer(g, g).astype(np.float32) for g in g1ds]

    # Telescoping: only `used` cascaded Gaussian levels are ever computed.
    used = pyramid_levels - 1
    taps = [[float(v) for v in g1ds[i]] for i in range(used)]   # baked constants
    pads = [(k - 1) // 2 for k in ksizes[:used]]
    pmax = max(pads)
    assert H > 2 * pmax, "height must exceed the Gaussian support"

    # Lane-dense width: pad W up to a multiple of 128 so stores are unmasked vst
    # and rolls never waste lanes.  Width validity (lane < W) is folded into the
    # horizontal tap masks so padded lanes stay exactly zero through the
    # cascade, reproducing zero-'same' padding at the original width W.
    Wp = _round_up(W, 128)
    assert Wp > 2 * pmax

    plane_bytes = 4 * _round_up(H, 8) * Wp

    vmem_cap = _vmem_capacity_bytes()
    # Stay well under physical VMEM (v7x 64 MiB -> ~56 MiB, v5e/v6e -> 96 MiB).
    vmem_limit = max(16 << 20, min(vmem_cap - (8 << 20), 96 << 20))

    if c_tile is None:
        c_tile = _pick_c_tile(B, C, plane_bytes, int(0.85 * vmem_limit))
    assert C % c_tile == 0
    # TODO(synk): halo'd H tiling for planes too large even at c_tile == 1.
    assert (7 * c_tile + 8) * plane_bytes <= vmem_limit, "plane too large for VMEM"

    def kernel_body(x_ref, out_ref):
        # ---- tiny per-step constants: tap-folded edge masks -------------------
        # Built from rolled iotas (convention-independent) but only on
        # single-channel slabs, never on full (c_tile,H,W) planes.
        lane = jax.lax.broadcasted_iota(jnp.int32, (1, 1, Wp), 2)
        rows = jax.lax.broadcasted_iota(jnp.int32, (1, H, Wp), 1)
        lane_valid = lane < W

        def no_wrap(iota, axis, s, amount):
            # True where the rolled source sits exactly `s` positions away,
            # i.e. the rotation did not wrap around the axis.
            src = pltpu.roll(iota, amount, axis=axis)
            return jnp.abs(src - iota) == s

        hmask = {}   # (lvl, s, amount) -> (1, 1, Wp) f32, tap folded in
        vmask = {}   # (lvl, s, amount) -> (1, H, Wp) f32, tap folded in
        for lvl in range(used):
            t, p = taps[lvl], pads[lvl]
            for s in range(1, p + 1):
                for amount in (s, Wp - s):
                    keep = no_wrap(lane, 2, s, amount) & lane_valid
                    hmask[(lvl, s, amount)] = (
                        jnp.where(keep, t[p + s], 0.0).astype(jnp.float32))
                for amount in (s, H - s):
                    keep = no_wrap(rows, 1, s, amount)
                    vmask[(lvl, s, amount)] = (
                        jnp.where(keep, t[p + s], 0.0).astype(jnp.float32))

        # ---- cascaded separable Gaussian: rolls + folded masks, no scratch ----
        def hpass(v, lvl):
            t, p = taps[lvl], pads[lvl]
            acc = v * t[p]
            for s in range(1, p + 1):
                for amount in (s, Wp - s):
                    acc = acc + pltpu.roll(v, amount, axis=2) * hmask[(lvl, s, amount)]
            return acc

        def vpass(v, lvl):
            t, p = taps[lvl], pads[lvl]
            acc = v * t[p]
            for s in range(1, p + 1):
                for amount in (s, H - s):
                    acc = acc + pltpu.roll(v, amount, axis=1) * vmask[(lvl, s, amount)]
            return acc

        g = x_ref[0].astype(jnp.float32)                      # (c_tile, H, Wp)
        for lvl in range(used):
            g = vpass(hpass(g, lvl), lvl)

        # Telescoped Laplacian sum; re-read x from the resident VMEM block so it
        # is not kept live across the whole cascade.
        out_ref[0] = (x_ref[0].astype(jnp.float32) - g).astype(out_ref.dtype)

    # TODO(synk): on v5e, consider pipeline_mode=pl.Buffered(3) on the input
    # BlockSpec if a profile shows exposed DMA at production shapes.
    f = pl.pallas_call(
        kernel_body,
        out_shape=jax.ShapeDtypeStruct((B, C, H, Wp), jnp.float32),
        grid_spec=pltpu.PrefetchScalarGridSpec(
            num_scalar_prefetch=0,
            grid=(B, C // c_tile),
            in_specs=[pl.BlockSpec((1, c_tile, H, Wp), lambda b, c: (b, c, 0, 0))],
            out_specs=pl.BlockSpec((1, c_tile, H, Wp), lambda b, c: (b, c, 0, 0)),
        ),
        compiler_params=pltpu.CompilerParams(
            dimension_semantics=("parallel", "parallel"),
            vmem_limit_bytes=int(vmem_limit),
        ),
    )

    def apply(x):
        assert x.shape == (B, C, H, W)
        xp = x if Wp == W else jnp.pad(x, ((0, 0), (0, 0), (0, 0), (0, Wp - W)))
        out = f(xp)
        return out if Wp == W else out[..., :W]

    return apply, kernels2d


def _reference_forward(x, kernels2d, pyramid_levels):
    # Pure-JAX replica of the PyTorch forward (NCHW, zero 'same' padding,
    # depthwise conv with channel-replicated full 2-D kernels).
    B, C, H, W = x.shape
    G = x
    pyramid = [G]
    for k in kernels2d:
        ksz = k.shape[0]
        p = (ksz - 1) // 2
        Gp = jnp.pad(G, ((0, 0), (0, 0), (p, p), (p, p)))
        out = jnp.zeros_like(G)
        for dy in range(ksz):
            for dx in range(ksz):
                out = out + Gp[:, :, dy:dy + H, dx:dx + W] * float(k[dy, dx])
        G = out
        pyramid.append(G)
    att = [pyramid[i - 1] - pyramid[i] for i in range(1, pyramid_levels)]
    return sum(att)


if __name__ == "__main__":
    B, C, H, W = 2, 4, 16, 16
    pyramid_levels = 3

    key = jax.random.PRNGKey(0)
    x = jax.random.normal(key, (B, C, H, W), dtype=jnp.float32)

    apply_fn, kernels2d = make_laplacian_pyramid(B, C, H, W, pyramid_levels)
    out = jax.block_until_ready(apply_fn(x))

    ref = jax.block_until_ready(_reference_forward(x, kernels2d, pyramid_levels))
    assert out.shape == (B, C, H, W)
    assert bool(jnp.allclose(out, ref, atol=1e-5, rtol=1e-5))

    print("KERNEL_OK")
</pallas_src>

<mosaic_0001>
module attributes {stable_mosaic.version = 11 : i64} {
  func.func @kernel_body(%arg0: i32, %arg1: i32, %arg2: memref<1x4x16x128xf32, #tpu.memory_space<vmem>>, %arg3: memref<1x4x16x128xf32, #tpu.memory_space<vmem>>) attributes {dimension_semantics = [#tpu.dimension_semantics<parallel>, #tpu.dimension_semantics<parallel>], iteration_bounds = array<i64: 2, 1>, scalar_prefetch = 0 : i64, scratch_operands = 0 : i64, tpu.core_type = #tpu.core_type<tc>, window_params = [{transform_indices = @transform_0, window_bounds = array<i64: 1, 4, 16, 128>}, {transform_indices = @transform_1, window_bounds = array<i64: 1, 4, 16, 128>}]} {
    %0 = tpu.iota {dimensions = array<i32: 2>} : vector<1x1x128xi32>
    %1 = tpu.iota {dimensions = array<i32: 1>} : vector<1x16x128xi32>
    %c16_i32 = arith.constant 16 : i32
    %2 = vector.broadcast %c16_i32 : i32 to vector<1x1x128xi32>
    %3 = arith.cmpi slt, %0, %2 : vector<1x1x128xi32>
    %c1_i32 = arith.constant 1 : i32
    %4 = tpu.dynamic_rotate %0 by %c1_i32 dim 2 : vector<1x1x128xi32>, i32 -> vector<1x1x128xi32>
    %5 = arith.subi %4, %0 : vector<1x1x128xi32>
    %6 = math.absi %5 : vector<1x1x128xi32>
    %c1_i32_0 = arith.constant 1 : i32
    %7 = vector.broadcast %c1_i32_0 : i32 to vector<1x1x128xi32>
    %8 = arith.cmpi eq, %6, %7 : vector<1x1x128xi32>
    %9 = arith.andi %8, %3 : vector<1x1x128xi1>
    %cst = arith.constant 0.310975164 : f32
    %cst_1 = arith.constant 0.000000e+00 : f32
    %10 = vector.broadcast %cst : f32 to vector<1x1x128xf32>
    %11 = vector.broadcast %cst_1 : f32 to vector<1x1x128xf32>
    %12 = arith.select %9, %10, %11 : vector<1x1x128xi1>, vector<1x1x128xf32>
    %c127_i32 = arith.constant 127 : i32
    %13 = tpu.dynamic_rotate %0 by %c127_i32 dim 2 : vector<1x1x128xi32>, i32 -> vector<1x1x128xi32>
    %14 = arith.subi %13, %0 : vector<1x1x128xi32>
    %15 = math.absi %14 : vector<1x1x128xi32>
    %c1_i32_2 = arith.constant 1 : i32
    %16 = vector.broadcast %c1_i32_2 : i32 to vector<1x1x128xi32>
    %17 = arith.cmpi eq, %15, %16 : vector<1x1x128xi32>
    %18 = arith.andi %17, %3 : vector<1x1x128xi1>
    %cst_3 = arith.constant 0.310975164 : f32
    %cst_4 = arith.constant 0.000000e+00 : f32
    %19 = vector.broadcast %cst_3 : f32 to vector<1x1x128xf32>
    %20 = vector.broadcast %cst_4 : f32 to vector<1x1x128xf32>
    %21 = arith.select %18, %19, %20 : vector<1x1x128xi1>, vector<1x1x128xf32>
    %c1_i32_5 = arith.constant 1 : i32
    %22 = tpu.dynamic_rotate %1 by %c1_i32_5 dim 1 : vector<1x16x128xi32>, i32 -> vector<1x16x128xi32>
    %23 = arith.subi %22, %1 : vector<1x16x128xi32>
    %24 = math.absi %23 : vector<1x16x128xi32>
    %c1_i32_6 = arith.constant 1 : i32
    %25 = vector.broadcast %c1_i32_6 : i32 to vector<1x16x128xi32>
    %26 = arith.cmpi eq, %24, %25 : vector<1x16x128xi32>
    %cst_7 = arith.constant 0.310975164 : f32
    %cst_8 = arith.constant 0.000000e+00 : f32
    %27 = vector.broadcast %cst_7 : f32 to vector<1x16x128xf32>
    %28 = vector.broadcast %cst_8 : f32 to vector<1x16x128xf32>
    %29 = arith.select %26, %27, %28 : vector<1x16x128xi1>, vector<1x16x128xf32>
    %c15_i32 = arith.constant 15 : i32
    %30 = tpu.dynamic_rotate %1 by %c15_i32 dim 1 : vector<1x16x128xi32>, i32 -> vector<1x16x128xi32>
    %31 = arith.subi %30, %1 : vector<1x16x128xi32>
    %32 = math.absi %31 : vector<1x16x128xi32>
    %c1_i32_9 = arith.constant 1 : i32
    %33 = vector.broadcast %c1_i32_9 : i32 to vector<1x16x128xi32>
    %34 = arith.cmpi eq, %32, %33 : vector<1x16x128xi32>
    %cst_10 = arith.constant 0.310975164 : f32
    %cst_11 = arith.constant 0.000000e+00 : f32
    %35 = vector.broadcast %cst_10 : f32 to vector<1x16x128xf32>
    %36 = vector.broadcast %cst_11 : f32 to vector<1x16x128xf32>
    %37 = arith.select %34, %35, %36 : vector<1x16x128xi1>, vector<1x16x128xf32>
    %c1_i32_12 = arith.constant 1 : i32
    %38 = tpu.dynamic_rotate %0 by %c1_i32_12 dim 2 : vector<1x1x128xi32>, i32 -> vector<1x1x128xi32>
    %39 = arith.subi %38, %0 : vector<1x1x128xi32>
    %40 = math.absi %39 : vector<1x1x128xi32>
    %c1_i32_13 = arith.constant 1 : i32
    %41 = vector.broadcast %c1_i32_13 : i32 to vector<1x1x128xi32>
    %42 = arith.cmpi eq, %40, %41 : vector<1x1x128xi32>
    %43 = arith.andi %42, %3 : vector<1x1x128xi1>
    %cst_14 = arith.constant 0.221551806 : f32
    %cst_15 = arith.constant 0.000000e+00 : f32
    %44 = vector.broadcast %cst_14 : f32 to vector<1x1x128xf32>
    %45 = vector.broadcast %cst_15 : f32 to vector<1x1x128xf32>
    %46 = arith.select %43, %44, %45 : vector<1x1x128xi1>, vector<1x1x128xf32>
    %c127_i32_16 = arith.constant 127 : i32
    %47 = tpu.dynamic_rotate %0 by %c127_i32_16 dim 2 : vector<1x1x128xi32>, i32 -> vector<1x1x128xi32>
    %48 = arith.subi %47, %0 : vector<1x1x128xi32>
    %49 = math.absi %48 : vector<1x1x128xi32>
    %c1_i32_17 = arith.constant 1 : i32
    %50 = vector.broadcast %c1_i32_17 : i32 to vector<1x1x128xi32>
    %51 = arith.cmpi eq, %49, %50 : vector<1x1x128xi32>
    %52 = arith.andi %51, %3 : vector<1x1x128xi1>
    %cst_18 = arith.constant 0.221551806 : f32
    %cst_19 = arith.constant 0.000000e+00 : f32
    %53 = vector.broadcast %cst_18 : f32 to vector<1x1x128xf32>
    %54 = vector.broadcast %cst_19 : f32 to vector<1x1x128xf32>
    %55 = arith.select %52, %53, %54 : vector<1x1x128xi1>, vector<1x1x128xf32>
    %c1_i32_20 = arith.constant 1 : i32
    %56 = tpu.dynamic_rotate %1 by %c1_i32_20 dim 1 : vector<1x16x128xi32>, i32 -> vector<1x16x128xi32>
    %57 = arith.subi %56, %1 : vector<1x16x128xi32>
    %58 = math.absi %57 : vector<1x16x128xi32>
    %c1_i32_21 = arith.constant 1 : i32
    %59 = vector.broadcast %c1_i32_21 : i32 to vector<1x16x128xi32>
    %60 = arith.cmpi eq, %58, %59 : vector<1x16x128xi32>
    %cst_22 = arith.constant 0.221551806 : f32
    %cst_23 = arith.constant 0.000000e+00 : f32
    %61 = vector.broadcast %cst_22 : f32 to vector<1x16x128xf32>
    %62 = vector.broadcast %cst_23 : f32 to vector<1x16x128xf32>
    %63 = arith.select %60, %61, %62 : vector<1x16x128xi1>, vector<1x16x128xf32>
    %c15_i32_24 = arith.constant 15 : i32
    %64 = tpu.dynamic_rotate %1 by %c15_i32_24 dim 1 : vector<1x16x128xi32>, i32 -> vector<1x16x128xi32>
    %65 = arith.subi %64, %1 : vector<1x16x128xi32>
    %66 = math.absi %65 : vector<1x16x128xi32>
    %c1_i32_25 = arith.constant 1 : i32
    %67 = vector.broadcast %c1_i32_25 : i32 to vector<1x16x128xi32>
    %68 = arith.cmpi eq, %66, %67 : vector<1x16x128xi32>
    %cst_26 = arith.constant 0.221551806 : f32
    %cst_27 = arith.constant 0.000000e+00 : f32
    %69 = vector.broadcast %cst_26 : f32 to vector<1x16x128xf32>
    %70 = vector.broadcast %cst_27 : f32 to vector<1x16x128xf32>
    %71 = arith.select %68, %69, %70 : vector<1x16x128xi1>, vector<1x16x128xf32>
    %c2_i32 = arith.constant 2 : i32
    %72 = tpu.dynamic_rotate %0 by %c2_i32 dim 2 : vector<1x1x128xi32>, i32 -> vector<1x1x128xi32>
    %73 = arith.subi %72, %0 : vector<1x1x128xi32>
    %74 = math.absi %73 : vector<1x1x128xi32>
    %c2_i32_28 = arith.constant 2 : i32
    %75 = vector.broadcast %c2_i32_28 : i32 to vector<1x1x128xi32>
    %76 = arith.cmpi eq, %74, %75 : vector<1x1x128xi32>
    %77 = arith.andi %76, %3 : vector<1x1x128xi1>
    %cst_29 = arith.constant 0.153168544 : f32
    %cst_30 = arith.constant 0.000000e+00 : f32
    %78 = vector.broadcast %cst_29 : f32 to vector<1x1x128xf32>
    %79 = vector.broadcast %cst_30 : f32 to vector<1x1x128xf32>
    %80 = arith.select %77, %78, %79 : vector<1x1x128xi1>, vector<1x1x128xf32>
    %c126_i32 = arith.constant 126 : i32
    %81 = tpu.dynamic_rotate %0 by %c126_i32 dim 2 : vector<1x1x128xi32>, i32 -> vector<1x1x128xi32>
    %82 = arith.subi %81, %0 : vector<1x1x128xi32>
    %83 = math.absi %82 : vector<1x1x128xi32>
    %c2_i32_31 = arith.constant 2 : i32
    %84 = vector.broadcast %c2_i32_31 : i32 to vector<1x1x128xi32>
    %85 = arith.cmpi eq, %83, %84 : vector<1x1x128xi32>
    %86 = arith.andi %85, %3 : vector<1x1x128xi1>
    %cst_32 = arith.constant 0.153168544 : f32
    %cst_33 = arith.constant 0.000000e+00 : f32
    %87 = vector.broadcast %cst_32 : f32 to vector<1x1x128xf32>
    %88 = vector.broadcast %cst_33 : f32 to vector<1x1x128xf32>
    %89 = arith.select %86, %87, %88 : vector<1x1x128xi1>, vector<1x1x128xf32>
    %c2_i32_34 = arith.constant 2 : i32
    %90 = tpu.dynamic_rotate %1 by %c2_i32_34 dim 1 : vector<1x16x128xi32>, i32 -> vector<1x16x128xi32>
    %91 = arith.subi %90, %1 : vector<1x16x128xi32>
    %92 = math.absi %91 : vector<1x16x128xi32>
    %c2_i32_35 = arith.constant 2 : i32
    %93 = vector.broadcast %c2_i32_35 : i32 to vector<1x16x128xi32>
    %94 = arith.cmpi eq, %92, %93 : vector<1x16x128xi32>
    %cst_36 = arith.constant 0.153168544 : f32
    %cst_37 = arith.constant 0.000000e+00 : f32
    %95 = vector.broadcast %cst_36 : f32 to vector<1x16x128xf32>
    %96 = vector.broadcast %cst_37 : f32 to vector<1x16x128xf32>
    %97 = arith.select %94, %95, %96 : vector<1x16x128xi1>, vector<1x16x128xf32>
    %c14_i32 = arith.constant 14 : i32
    %98 = tpu.dynamic_rotate %1 by %c14_i32 dim 1 : vector<1x16x128xi32>, i32 -> vector<1x16x128xi32>
    %99 = arith.subi %98, %1 : vector<1x16x128xi32>
    %100 = math.absi %99 : vector<1x16x128xi32>
    %c2_i32_38 = arith.constant 2 : i32
    %101 = vector.broadcast %c2_i32_38 : i32 to vector<1x16x128xi32>
    %102 = arith.cmpi eq, %100, %101 : vector<1x16x128xi32>
    %cst_39 = arith.constant 0.153168544 : f32
    %cst_40 = arith.constant 0.000000e+00 : f32
    %103 = vector.broadcast %cst_39 : f32 to vector<1x16x128xf32>
    %104 = vector.broadcast %cst_40 : f32 to vector<1x16x128xf32>
    %105 = arith.select %102, %103, %104 : vector<1x16x128xi1>, vector<1x16x128xf32>
    %c0 = arith.constant 0 : index
    %c0_41 = arith.constant 0 : index
    %c0_42 = arith.constant 0 : index
    %c0_43 = arith.constant 0 : index
    %106 = vector.load %arg2[%c0, %c0_41, %c0_42, %c0_43] : memref<1x4x16x128xf32, #tpu.memory_space<vmem>>, vector<1x4x16x128xf32>
    %107 = vector.shape_cast %106 : vector<1x4x16x128xf32> to vector<4x16x128xf32>
    %cst_44 = arith.constant 0.378049672 : f32
    %108 = vector.broadcast %cst_44 : f32 to vector<4x16x128xf32>
    %109 = arith.mulf %107, %108 : vector<4x16x128xf32>
    %c1_i32_45 = arith.constant 1 : i32
    %110 = tpu.dynamic_rotate %107 by %c1_i32_45 dim 2 : vector<4x16x128xf32>, i32 -> vector<4x16x128xf32>
    %111 = vector.broadcast %12 : vector<1x1x128xf32> to vector<4x16x128xf32>
    %112 = arith.mulf %110, %111 : vector<4x16x128xf32>
    %113 = arith.addf %109, %112 : vector<4x16x128xf32>
    %c127_i32_46 = arith.constant 127 : i32
    %114 = tpu.dynamic_rotate %107 by %c127_i32_46 dim 2 : vector<4x16x128xf32>, i32 -> vector<4x16x128xf32>
    %115 = vector.broadcast %21 : vector<1x1x128xf32> to vector<4x16x128xf32>
    %116 = arith.mulf %114, %115 : vector<4x16x128xf32>
    %117 = arith.addf %113, %116 : vector<4x16x128xf32>
    %cst_47 = arith.constant 0.378049672 : f32
    %118 = vector.broadcast %cst_47 : f32 to vector<4x16x128xf32>
    %119 = arith.mulf %117, %118 : vector<4x16x128xf32>
    %c1_i32_48 = arith.constant 1 : i32
    %120 = tpu.dynamic_rotate %117 by %c1_i32_48 dim 1 : vector<4x16x128xf32>, i32 -> vector<4x16x128xf32>
    %121 = vector.broadcast %29 : vector<1x16x128xf32> to vector<4x16x128xf32>
    %122 = arith.mulf %120, %121 : vector<4x16x128xf32>
    %123 = arith.addf %119, %122 : vector<4x16x128xf32>
    %c15_i32_49 = arith.constant 15 : i32
    %124 = tpu.dynamic_rotate %117 by %c15_i32_49 dim 1 : vector<4x16x128xf32>, i32 -> vector<4x16x128xf32>
    %125 = vector.broadcast %37 : vector<1x16x128xf32> to vector<4x16x128xf32>
    %126 = arith.mulf %124, %125 : vector<4x16x128xf32>
    %127 = arith.addf %123, %126 : vector<4x16x128xf32>
    %cst_50 = arith.constant 0.2505593 : f32
    %128 = vector.broadcast %cst_50 : f32 to vector<4x16x128xf32>
    %129 = arith.mulf %127, %128 : vector<4x16x128xf32>
    %c1_i32_51 = arith.constant 1 : i32
    %130 = tpu.dynamic_rotate %127 by %c1_i32_51 dim 2 : vector<4x16x128xf32>, i32 -> vector<4x16x128xf32>
    %131 = vector.broadcast %46 : vector<1x1x128xf32> to vector<4x16x128xf32>
    %132 = arith.mulf %130, %131 : vector<4x16x128xf32>
    %133 = arith.addf %129, %132 : vector<4x16x128xf32>
    %c127_i32_52 = arith.constant 127 : i32
    %134 = tpu.dynamic_rotate %127 by %c127_i32_52 dim 2 : vector<4x16x128xf32>, i32 -> vector<4x16x128xf32>
    %135 = vector.broadcast %55 : vector<1x1x128xf32> to vector<4x16x128xf32>
    %136 = arith.mulf %134, %135 : vector<4x16x128xf32>
    %137 = arith.addf %133, %136 : vector<4x16x128xf32>
    %c2_i32_53 = arith.constant 2 : i32
    %138 = tpu.dynamic_rotate %127 by %c2_i32_53 dim 2 : vector<4x16x128xf32>, i32 -> vector<4x16x128xf32>
    %139 = vector.broadcast %80 : vector<1x1x128xf32> to vector<4x16x128xf32>
    %140 = arith.mulf %138, %139 : vector<4x16x128xf32>
    %141 = arith.addf %137, %140 : vector<4x16x128xf32>
    %c126_i32_54 = arith.constant 126 : i32
    %142 = tpu.dynamic_rotate %127 by %c126_i32_54 dim 2 : vector<4x16x128xf32>, i32 -> vector<4x16x128xf32>
    %143 = vector.broadcast %89 : vector<1x1x128xf32> to vector<4x16x128xf32>
    %144 = arith.mulf %142, %143 : vector<4x16x128xf32>
    %145 = arith.addf %141, %144 : vector<4x16x128xf32>
    %cst_55 = arith.constant 0.2505593 : f32
    %146 = vector.broadcast %cst_55 : f32 to vector<4x16x128xf32>
    %147 = arith.mulf %145, %146 : vector<4x16x128xf32>
    %c1_i32_56 = arith.constant 1 : i32
    %148 = tpu.dynamic_rotate %145 by %c1_i32_56 dim 1 : vector<4x16x128xf32>, i32 -> vector<4x16x128xf32>
    %149 = vector.broadcast %63 : vector<1x16x128xf32> to vector<4x16x128xf32>
    %150 = arith.mulf %148, %149 : vector<4x16x128xf32>
    %151 = arith.addf %147, %150 : vector<4x16x128xf32>
    %c15_i32_57 = arith.constant 15 : i32
    %152 = tpu.dynamic_rotate %145 by %c15_i32_57 dim 1 : vector<4x16x128xf32>, i32 -> vector<4x16x128xf32>
    %153 = vector.broadcast %71 : vector<1x16x128xf32> to vector<4x16x128xf32>
    %154 = arith.mulf %152, %153 : vector<4x16x128xf32>
    %155 = arith.addf %151, %154 : vector<4x16x128xf32>
    %c2_i32_58 = arith.constant 2 : i32
    %156 = tpu.dynamic_rotate %145 by %c2_i32_58 dim 1 : vector<4x16x128xf32>, i32 -> vector<4x16x128xf32>
    %157 = vector.broadcast %97 : vector<1x16x128xf32> to vector<4x16x128xf32>
    %158 = arith.mulf %156, %157 : vector<4x16x128xf32>
    %159 = arith.addf %155, %158 : vector<4x16x128xf32>
    %c14_i32_59 = arith.constant 14 : i32
    %160 = tpu.dynamic_rotate %145 by %c14_i32_59 dim 1 : vector<4x16x128xf32>, i32 -> vector<4x16x128xf32>
    %161 = vector.broadcast %105 : vector<1x16x128xf32> to vector<4x16x128xf32>
    %162 = arith.mulf %160, %161 : vector<4x16x128xf32>
    %163 = arith.addf %159, %162 : vector<4x16x128xf32>
    %c0_60 = arith.constant 0 : index
    %c0_61 = arith.constant 0 : index
    %c0_62 = arith.constant 0 : index
    %c0_63 = arith.constant 0 : index
    %164 = vector.load %arg2[%c0_60, %c0_61, %c0_62, %c0_63] : memref<1x4x16x128xf32, #tpu.memory_space<vmem>>, vector<1x4x16x128xf32>
    %165 = vector.shape_cast %164 : vector<1x4x16x128xf32> to vector<4x16x128xf32>
    %166 = arith.subf %165, %163 : vector<4x16x128xf32>
    %c0_64 = arith.constant 0 : index
    %c0_65 = arith.constant 0 : index
    %c0_66 = arith.constant 0 : index
    %c0_67 = arith.constant 0 : index
    %167 = vector.load %arg3[%c0_64, %c0_65, %c0_66, %c0_67] : memref<1x4x16x128xf32, #tpu.memory_space<vmem>>, vector<1x4x16x128xf32>
    %168 = vector.shape_cast %167 : vector<1x4x16x128xf32> to vector<4x16x128xf32>
    %169 = vector.shape_cast %166 : vector<4x16x128xf32> to vector<1x4x16x128xf32>
    tpu.vector_store %arg3[%c0_64, %c0_65, %c0_66, %c0_67], %169 {strides = array<i32>} : memref<1x4x16x128xf32, #tpu.memory_space<vmem>>, vector<1x4x16x128xf32>,
    return
  }
  func.func @transform_0(%arg0: i32, %arg1: i32) -> (i32, i32, i32, i32) {
    %c0_i32 = arith.constant 0 : i32
    %c0_i32_0 = arith.constant 0 : i32
    %c0_i32_1 = arith.constant 0 : i32
    return %arg0, %arg1, %c0_i32, %c0_i32_0 : i32, i32, i32, i32
  }
  func.func @transform_1(%arg0: i32, %arg1: i32) -> (i32, i32, i32, i32) {
    %c0_i32 = arith.constant 0 : i32
    %c0_i32_0 = arith.constant 0 : i32
    %c0_i32_1 = arith.constant 0 : i32
    return %arg0, %arg1, %c0_i32, %c0_i32_0 : i32, i32, i32, i32
  }
}

</mosaic_0001>

<llo_original>
// kernel: tpu_custom_call.1
$region0: #{tpu_custom_call.1}
  #allocation0 [shape = 'u32[]', space=smem, size = 0x4, offset = 0x4, fixed_abs, tag = 'smem constant byte address 0x4 - core index']
  #allocation1 [shape = 'u32[72,128]{1,0:T(1,128)}', space=vmem, size = 0x9000, scoped, tag = 'internal scratch']
  %s0 = inlined_call_operand.hbm [shape: f32[2,4,16,128], index: 0, kind: input, shape index: {}]
  %s1 = inlined_call_operand.hbm [shape: f32[2,4,16,128], index: 1, kind: output, shape index: {}]
  %s2 = sld [smem:[#allocation0]]
  $region41: #{tpu_custom_call.1} parent=0
    _
  %s4 = ssub.s32 1, %s2
  %s5 = scalar_select 0, %s4, %s2
  $region1: #{tpu_custom_call.1} parent=0
    #allocation2 [shape = 'u8[65536]{0}', space=vmem, size = 0x10000, scoped, tag = 'input window, operand 0']
    #allocation3 [shape = 's32[2]{0}', space=sflag, size = 0x8, scoped, tag = 'scoped memory for tpu_custom_call.1']
    #allocation4 [shape = 's32[2]{0}', space=sflag, size = 0x8, scoped, tag = 'scoped memory for tpu_custom_call.1']
    #allocation5 [shape = 'u8[65536]{0}', space=vmem, size = 0x10000, scoped, tag = 'output window, operand 0']
    %6 = vsyncpa [#allocation3], 0
    %s7 = scalar_lea.sflag [#allocation3], 1
    %8 = vsyncpa %s7, 0
    %9 = vsyncpa [#allocation4], 0
    %s10 = scalar_lea.sflag [#allocation4], 1
    %11 = vsyncpa %s10, 0
    loop: start=0, step=1, limit=4
    $region2: #{tpu_custom_call.1} parent=1 // loop_pre_header
      _
    $region3: #{tpu_custom_call.1} parent=1 // loop_header
      %s13 = sphi 0, %s17
      %p14 = scmp.ge.s32.totalorder %s13, 4
      %s20 = sphi 0, %s32
      %s21 = sphi 0, %s28
      %s22 = sphi 0, %s20
      %s23 = sphi 0, %s21
      %s24 = sphi 0, %s22
      %s25 = sphi 0, %s23
      %s37 = sphi 0, %s39
      %s40 = sphi 0, %s37
      %s41 = sphi 0, %s40
      %s57 = sphi 0, %s41
      %s65 = sphi 0, %s67
      %s68 = sphi 0, %s65
      %s69 = sphi 0, %s68
      %s85 = sphi 0, %s69
    $region4: #{tpu_custom_call.1} parent=1 // loop_header_branch
      %16 = sbr.rel (%p14) target = $region8
    $region5: #{tpu_custom_call.1} parent=1 // loop_body
      %s18 = ssub.s32 %s13, 1
      %s19 = ssub.s32 %s13, 2
      %s26 = sadd.s32 1, %s21
      %p27 = scmp.ge.s32.totalorder %s26, 1
      %s28 = scalar_select %p27, 0, %s26
      %s29 = sadd.s32 1, %s20
      %s30 = scalar_select %p27, %s29, %s20
      %p31 = scmp.ge.s32.totalorder %s30, 2
      %s32 = scalar_select %p31, 0, %s30
      %s33 = ssub.s32 %s20, %s32
      %s34 = ssub.s32 %s21, %s28
      %s35 = sor.u32 %s33, %s34
      %p36 = scmp.eq.s32.totalorder %s35, 0
      %s38 = sadd.s32 %s37, 1
      %s39 = scalar_select %p36, %s37, %s38
      %p42 = pneg %p36
      %p43 = scmp.eq.s32.totalorder %s13, 1
      %p44 = por %p42, %p43
      %p45 = scmp.ne.s32.totalorder %s37, %s40
      %p46 = scmp.eq.s32.totalorder %s13, 0
      %p47 = por %p45, %p46
      %p48 = scmp.ne.s32.totalorder %s37, %s40
      %p49 = scmp.eq.s32.totalorder %s18, 1
      %p50 = por %p48, %p49
      %p51 = scmp.ne.s32.totalorder %s40, %s41
      %p52 = scmp.eq.s32.totalorder %s18, 0
      %p53 = por %p51, %p52
      %p54 = scmp.ne.s32.totalorder %s40, %s41
      %p55 = scmp.eq.s32.totalorder %s19, 1
      %p56 = por %p54, %p55
      %p58 = scmp.ne.s32.totalorder %s41, %s57
      %p59 = scmp.eq.s32.totalorder %s19, 0
      %p60 = por %p58, %p59
      %s61 = ssub.s32 %s20, %s32
      %s62 = ssub.s32 %s21, %s28
      %s63 = sor.u32 %s61, %s62
      %p64 = scmp.eq.s32.totalorder %s63, 0
      %s66 = sadd.s32 %s65, 1
      %s67 = scalar_select %p64, %s65, %s66
      %p70 = pneg %p64
      %p71 = scmp.eq.s32.totalorder %s13, 1
      %p72 = por %p70, %p71
      %p73 = scmp.ne.s32.totalorder %s65, %s68
      %p74 = scmp.eq.s32.totalorder %s13, 0
      %p75 = por %p73, %p74
      %p76 = scmp.ne.s32.totalorder %s65, %s68
      %p77 = scmp.eq.s32.totalorder %s18, 1
      %p78 = por %p76, %p77
      %p79 = scmp.ne.s32.totalorder %s68, %s69
      %p80 = scmp.eq.s32.totalorder %s18, 0
      %p81 = por %p79, %p80
      %p82 = scmp.ne.s32.totalorder %s68, %s69
      %p83 = scmp.eq.s32.totalorder %s19, 1
      %p84 = por %p82, %p83
      %p86 = scmp.ne.s32.totalorder %s69, %s85
      %p87 = scmp.eq.s32.totalorder %s19, 0
      %p88 = por %p86, %p87
      %p89 = scmp.le.s32.totalorder 1, %s13
      %p90 = scmp.lt.s32.totalorder %s13, 3
      %p91 = pnand %p89, %p90
      %p92 = pneg %p91
      // Predicated region
      $region9: #{tpu_custom_call.1} parent=5 // pred_check
        _
      $region10: #{tpu_custom_call.1} parent=5 // pred_check_branch
        %94 = sbr.rel (%p91) target = $region12
      $region11: #{tpu_custom_call.1} parent=5 // pred_region
        %s95 = ssub.s32 %s13, 1
      $region12: #{tpu_custom_call.1} parent=5 // pred_fallthru
        _
      %p96 = scmp.lt.s32.totalorder %s13, 2
      // Predicated region
      $region13: #{tpu_custom_call.1} parent=5 // pred_check
        %p97 = pneg %p96
      $region14: #{tpu_custom_call.1} parent=5 // pred_check_branch
        %99 = sbr.rel (%p97) target = $region16
      $region15: #{tpu_custom_call.1} parent=5 // pred_region
        // Predicated region
        $region17: #{tpu_custom_call.1} parent=15 // pred_check
          %p100 = pneg %p47
        $region18: #{tpu_custom_call.1} parent=15 // pred_check_branch
          %102 = sbr.rel (%p100) target = $region20
        $region19: #{tpu_custom_call.1} parent=15 // pred_region
          %s103 = sand.u32 %s37, 1
          %s104 = scalar_lea.sflag [#allocation3], %s103
          %s105 = sand.u32 %s37, 1
          %s106 = smul.addr %s105, 64
          %s107 = scalar_lea.vmem [#allocation2], %s106
          %s108 = smul.u32 4, %s21
          %110 = vsyncadd %s104, 0
          %s111 = smul.addr %s108, 2
          %s112 = smul.addr %s20, 8
          %s113 = sadd.s32 %s111, %s112
          %s114 = smul.addr %s113, 8
          %s115 = scalar_lea.hbm %s0, %s114
          %s116 = sshll.u32 %s115, 4
          %s117 = int_to_ptr.hbm [resolvable:$true] %s116
          %s118 = sshll.u32 %s107, 4
          %s119 = int_to_ptr.vmem [resolvable:$true] %s118
          %124 = dma.hbm_to_vmem [thread:$0]  %s117, 1024, %s119, %s104, 128, 128, 8
        $region20: #{tpu_custom_call.1} parent=15 // pred_fallthru
          _
      $region16: #{tpu_custom_call.1} parent=5 // pred_fallthru
        _
      %p125 = scmp.le.s32.totalorder 1, %s13
      %p126 = scmp.lt.s32.totalorder %s13, 3
      %p127 = pnand %p125, %p126
      %p128 = pneg %p127
      // Predicated region
      $region21: #{tpu_custom_call.1} parent=5 // pred_check
        _
      $region22: #{tpu_custom_call.1} parent=5 // pred_check_branch
        %130 = sbr.rel (%p127) target = $region24
      $region23: #{tpu_custom_call.1} parent=5 // pred_region
        %s131 = ssub.s32 %s13, 1
        %s132 = sand.u32 %s40, 1
        %s133 = scalar_lea.sflag [#allocation3], %s132
        %s134 = sand.u32 %s40, 1
        %s135 = smul.addr %s134, 64
        %s136 = scalar_lea.vmem [#allocation2], %s135
        // Predicated region
        $region25: #{tpu_custom_call.1} parent=23 // pred_check
          %p137 = pneg %p53
        $region26: #{tpu_custom_call.1} parent=23 // pred_check_branch
          %139 = sbr.rel (%p137) target = $region28
        $region27: #{tpu_custom_call.1} parent=23 // pred_region
          %141 = dma.done %s133, 1024
        $region28: #{tpu_custom_call.1} parent=23 // pred_fallthru
          _
        %s142 = sand.u32 %s40, 1
        %s143 = scalar_lea.sflag [#allocation3], %s142
        %s144 = sand.u32 %s40, 1
        %s145 = smul.addr %s144, 64
        %s146 = scalar_lea.vmem [#allocation2], %s145
        %p147 = pneg %p53
        %p148 = pneg %p50
        %p149 = pneg %p81
        %p150 = pneg %p78
        %s151 = sand.u32 %s68, 1
        %s152 = scalar_lea.sflag [#allocation4], %s151
        %s153 = sand.u32 %s68, 1
        %s154 = smul.addr %s153, 64
        %s155 = scalar_lea.vmem [#allocation5], %s154
        %s156 = smul.u32 4, %s23
        %s157 = smul.u32 4, %s23
        %v158 = vlaneseq
        %v159 = vand.u32 %v158, 127
        %v160 = vlaneseq
        %v161 = vshrl.u32 %v160, 7
        %v162 = vadd.s32 %v161, 8
        %vm163 = vcmp.lt.s32.totalorder %v159, 16
        %164 = vrot.lane.b32.xlu0 %v159, 1
        %v165 = vpop.permute.xlu0 %164
        %v166 = vsub.s32 %v165, %v159
        %vm167 = vcmp.lt.s32.totalorder %v166, 0
        %v168 = vsub.s32 0, %v166
        %v169 = vsel %vm167, %v168, %v166
        %vm170 = vcmp.eq.s32.totalorder %v169, 1
        %vm171 = vmand %vm170, %vm163
        %v172 = vsel %vm171, 0.31097516, 0.0
        %173 = vrot.lane.b32.xlu0 %v159, 127
        %v174 = vpop.permute.xlu0 %173
        %v175 = vsub.s32 %v174, %v159
        %vm176 = vcmp.lt.s32.totalorder %v175, 0
        %v177 = vsub.s32 0, %v175
        %v178 = vsel %vm176, %v177, %v175
        %vm179 = vcmp.eq.s32.totalorder %v178, 1
        %vm180 = vmand %vm179, %vm163
        %v181 = vsel %vm180, 0.31097516, 0.0
        %v182 = vrot.slane %v161, 7
        %v183 = vrot.slane %v162, 7
        %vm184 = vcmp.lt.s32.totalorder %v161, 1
        %v185 = vsel %vm184, %v182, %v183
        %v186 = vsel %vm184, %v183, %v182
        %v187 = vsub.s32 %v186, %v161
        %v188 = vsub.s32 %v185, %v162
        %vm189 = vcmp.lt.s32.totalorder %v187, 0
        %v190 = vsub.s32 0, %v187
        %v191 = vsel %vm189, %v190, %v187
        %vm192 = vcmp.lt.s32.totalorder %v188, 0
        %v193 = vsub.s32 0, %v188
        %v194 = vsel %vm192, %v193, %v188
        %vm195 = vcmp.eq.s32.totalorder %v191, 1
        %vm196 = vcmp.eq.s32.totalorder %v194, 1
        %v197 = vsel %vm195, 0.31097516, 0.0
        %v198 = vsel %vm196, 0.31097516, 0.0
        %v199 = vrot.slane %v161, 1
        %v200 = vrot.slane %v162, 1
        %vm201 = vcmp.lt.s32.totalorder %v161, 7
        %v202 = vsel %vm201, %v199, %v200
        %v203 = vsel %vm201, %v200, %v199
        %v204 = vsub.s32 %v202, %v161
        %v205 = vsub.s32 %v203, %v162
        %vm206 = vcmp.lt.s32.totalorder %v204, 0
        %v207 = vsub.s32 0, %v204
        %v208 = vsel %vm206, %v207, %v204
        %vm209 = vcmp.lt.s32.totalorder %v205, 0
        %v210 = vsub.s32 0, %v205
        %v211 = vsel %vm209, %v210, %v205
        %vm212 = vcmp.eq.s32.totalorder %v208, 1
        %vm213 = vcmp.eq.s32.totalorder %v211, 1
        %v214 = vsel %vm212, 0.31097516, 0.0
        %v215 = vsel %vm213, 0.31097516, 0.0
        %v216 = vsel %vm171, 0.2215518, 0.0
        %v217 = vsel %vm180, 0.2215518, 0.0
        %v218 = vsel %vm195, 0.2215518, 0.0
        %v219 = vsel %vm196, 0.2215518, 0.0
        %v220 = vsel %vm212, 0.2215518, 0.0
        %v221 = vsel %vm213, 0.2215518, 0.0
        %222 = vrot.lane.b32.xlu0 %v159, 2
        %v223 = vpop.permute.xlu0 %222
        %v224 = vsub.s32 %v223, %v159
        %vm225 = vcmp.lt.s32.totalorder %v224, 0
        %v226 = vsub.s32 0, %v224
        %v227 = vsel %vm225, %v226, %v224
        %vm228 = vcmp.eq.s32.totalorder %v227, 2
        %vm229 = vmand %vm228, %vm163
        %v230 = vsel %vm229, 0.15316854, 0.0
        %231 = vrot.lane.b32.xlu0 %v159, 126
        %v232 = vpop.permute.xlu0 %231
        %v233 = vsub.s32 %v232, %v159
        %vm234 = vcmp.lt.s32.totalorder %v233, 0
        %v235 = vsub.s32 0, %v233
        %v236 = vsel %vm234, %v235, %v233
        %vm237 = vcmp.eq.s32.totalorder %v236, 2
        %vm238 = vmand %vm237, %vm163
        %v239 = vsel %vm238, 0.15316854, 0.0
        %v240 = vrot.slane %v161, 6
        %v241 = vrot.slane %v162, 6
        %vm242 = vcmp.lt.s32.totalorder %v161, 2
        %v243 = vsel %vm242, %v240, %v241
        %v244 = vsel %vm242, %v241, %v240
        %v245 = vsub.s32 %v244, %v161
        %v246 = vsub.s32 %v243, %v162
        %vm247 = vcmp.lt.s32.totalorder %v245, 0
        %v248 = vsub.s32 0, %v245
        %v249 = vsel %vm247, %v248, %v245
        %vm250 = vcmp.lt.s32.totalorder %v246, 0
        %v251 = vsub.s32 0, %v246
        %v252 = vsel %vm250, %v251, %v246
        %vm253 = vcmp.eq.s32.totalorder %v249, 2
        %vm254 = vcmp.eq.s32.totalorder %v252, 2
        %v255 = vsel %vm253, 0.15316854, 0.0
        %v256 = vsel %vm254, 0.15316854, 0.0
        %v257 = vrot.slane %v161, 2
        %v258 = vrot.slane %v162, 2
        %vm259 = vcmp.lt.s32.totalorder %v161, 6
        %v260 = vsel %vm259, %v257, %v258
        %v261 = vsel %vm259, %v258, %v257
        %v262 = vsub.s32 %v260, %v161
        %v263 = vsub.s32 %v261, %v162
        %vm264 = vcmp.lt.s32.totalorder %v262, 0
        %v265 = vsub.s32 0, %v262
        %v266 = vsel %vm264, %v265, %v262
        %vm267 = vcmp.lt.s32.totalorder %v263, 0
        %v268 = vsub.s32 0, %v263
        %v269 = vsel %vm267, %v268, %v263
        %vm270 = vcmp.eq.s32.totalorder %v266, 2
        %vm271 = vcmp.eq.s32.totalorder %v269, 2
        %v272 = vsel %vm270, 0.15316854, 0.0
        %v273 = vsel %vm271, 0.15316854, 0.0
        %v274 = vld [vmem:[%s136] sm:$0xff]
        %v275 = vld [vmem:[%s136 + $0x8] sm:$0xff]
        %v276 = vld [vmem:[%s136 + $0x10] sm:$0xff]
        %v277 = vld [vmem:[%s136 + $0x18] sm:$0xff]
        %v278 = vld [vmem:[%s136 + $0x20] sm:$0xff]
        %v279 = vld [vmem:[%s136 + $0x28] sm:$0xff]
        %v280 = vld [vmem:[%s136 + $0x30] sm:$0xff]
        %v281 = vld [vmem:[%s136 + $0x38] sm:$0xff]
        %v282 = vmul.f32 %v274, 0.37804967
        %v283 = vmul.f32 %v275, 0.37804967
        %v284 = vmul.f32 %v276, 0.37804967
        %v285 = vmul.f32 %v277, 0.37804967
        %v286 = vmul.f32 %v278, 0.37804967
        %v287 = vmul.f32 %v279, 0.37804967
        %v288 = vmul.f32 %v280, 0.37804967
        %v289 = vmul.f32 %v281, 0.37804967
        %290 = vrot.lane.b32.xlu0 %v274, 1
        %v291 = vpop.permute.xlu0 %290
        %292 = vrot.lane.b32.xlu0 %v275, 1
        %v293 = vpop.permute.xlu0 %292
        %294 = vrot.lane.b32.xlu0 %v276, 1
        %v295 = vpop.permute.xlu0 %294
        %296 = vrot.lane.b32.xlu0 %v277, 1
        %v297 = vpop.permute.xlu0 %296
        %298 = vrot.lane.b32.xlu0 %v278, 1
        %v299 = vpop.permute.xlu0 %298
        %300 = vrot.lane.b32.xlu0 %v279, 1
        %v301 = vpop.permute.xlu0 %300
        %302 = vrot.lane.b32.xlu0 %v280, 1
        %v303 = vpop.permute.xlu0 %302
        %304 = vrot.lane.b32.xlu0 %v281, 1
        %v305 = vpop.permute.xlu0 %304
        %v306 = vperm.slane %v172, 0
        %v307 = vmul.f32 %v291, %v306
        %v308 = vmul.f32 %v293, %v306
        %v309 = vmul.f32 %v295, %v306
        %v310 = vmul.f32 %v297, %v306
        %v311 = vmul.f32 %v299, %v306
        %v312 = vmul.f32 %v301, %v306
        %v313 = vmul.f32 %v303, %v306
        %v314 = vmul.f32 %v305, %v306
        %v315 = vadd.f32 %v282, %v307
        %v316 = vadd.f32 %v283, %v308
        %v317 = vadd.f32 %v284, %v309
        %v318 = vadd.f32 %v285, %v310
        %v319 = vadd.f32 %v286, %v311
        %v320 = vadd.f32 %v287, %v312
        %v321 = vadd.f32 %v288, %v313
        %v322 = vadd.f32 %v289, %v314
        %323 = vrot.lane.b32.xlu0 %v274, 127
        %v324 = vpop.permute.xlu0 %323
        %325 = vrot.lane.b32.xlu0 %v275, 127
        %v326 = vpop.permute.xlu0 %325
        %327 = vrot.lane.b32.xlu0 %v276, 127
        %v328 = vpop.permute.xlu0 %327
        %329 = vrot.lane.b32.xlu0 %v277, 127
        %v330 = vpop.permute.xlu0 %329
        %331 = vrot.lane.b32.xlu0 %v278, 127
        %v332 = vpop.permute.xlu0 %331
        %333 = vrot.lane.b32.xlu0 %v279, 127
        %v334 = vpop.permute.xlu0 %333
        %335 = vrot.lane.b32.xlu0 %v280, 127
        %v336 = vpop.permute.xlu0 %335
        %337 = vrot.lane.b32.xlu0 %v281, 127
        %v338 = vpop.permute.xlu0 %337
        %v339 = vperm.slane %v181, 0
        %v340 = vmul.f32 %v324, %v339
        %v341 = vmul.f32 %v326, %v339
        %v342 = vmul.f32 %v328, %v339
        %v343 = vmul.f32 %v330, %v339
        %v344 = vmul.f32 %v332, %v339
        %v345 = vmul.f32 %v334, %v339
        %v346 = vmul.f32 %v336, %v339
        %v347 = vmul.f32 %v338, %v339
        %v348 = vadd.f32 %v315, %v340
        %v349 = vadd.f32 %v316, %v341
        %v350 = vadd.f32 %v317, %v342
        %v351 = vadd.f32 %v318, %v343
        %v352 = vadd.f32 %v319, %v344
        %v353 = vadd.f32 %v320, %v345
        %v354 = vadd.f32 %v321, %v346
        %v355 = vadd.f32 %v322, %v347
        %v356 = vmul.f32 %v348, 0.37804967
        %v357 = vmul.f32 %v349, 0.37804967
        %v358 = vmul.f32 %v350, 0.37804967
        %v359 = vmul.f32 %v351, 0.37804967
        %v360 = vmul.f32 %v352, 0.37804967
        %v361 = vmul.f32 %v353, 0.37804967
        %v362 = vmul.f32 %v354, 0.37804967
        %v363 = vmul.f32 %v355, 0.37804967
        %v364 = vrot.slane %v348, 7
        %v365 = vrot.slane %v350, 7
        %v366 = vrot.slane %v352, 7
        %v367 = vrot.slane %v354, 7
        %v368 = vrot.slane %v349, 7
        %v369 = vrot.slane %v351, 7
        %v370 = vrot.slane %v353, 7
        %v371 = vrot.slane %v355, 7
        %v372 = vsel %vm184, %v364, %v368
        %v373 = vsel %vm184, %v365, %v369
        %v374 = vsel %vm184, %v366, %v370
        %v375 = vsel %vm184, %v367, %v371
        %v376 = vsel %vm184, %v368, %v364
        %v377 = vsel %vm184, %v369, %v365
        %v378 = vsel %vm184, %v370, %v366
        %v379 = vsel %vm184, %v371, %v367
        %v380 = vmul.f32 %v376, %v197
        %v381 = vmul.f32 %v372, %v198
        %v382 = vmul.f32 %v377, %v197
        %v383 = vmul.f32 %v373, %v198
        %v384 = vmul.f32 %v378, %v197
        %v385 = vmul.f32 %v374, %v198
        %v386 = vmul.f32 %v379, %v197
        %v387 = vmul.f32 %v375, %v198
        %v388 = vadd.f32 %v356, %v380
        %v389 = vadd.f32 %v357, %v381
        %v390 = vadd.f32 %v358, %v382
        %v391 = vadd.f32 %v359, %v383
        %v392 = vadd.f32 %v360, %v384
        %v393 = vadd.f32 %v361, %v385
        %v394 = vadd.f32 %v362, %v386
        %v395 = vadd.f32 %v363, %v387
        %v396 = vrot.slane %v348, 1
        %v397 = vrot.slane %v350, 1
        %v398 = vrot.slane %v352, 1
        %v399 = vrot.slane %v354, 1
        %v400 = vrot.slane %v349, 1
        %v401 = vrot.slane %v351, 1
        %v402 = vrot.slane %v353, 1
        %v403 = vrot.slane %v355, 1
        %v404 = vsel %vm201, %v396, %v400
        %v405 = vsel %vm201, %v397, %v401
        %v406 = vsel %vm201, %v398, %v402
        %v407 = vsel %vm201, %v399, %v403
        %v408 = vsel %vm201, %v400, %v396
        %v409 = vsel %vm201, %v401, %v397
        %v410 = vsel %vm201, %v402, %v398
        %v411 = vsel %vm201, %v403, %v399
        %v412 = vmul.f32 %v404, %v214
        %v413 = vmul.f32 %v408, %v215
        %v414 = vmul.f32 %v405, %v214
        %v415 = vmul.f32 %v409, %v215
        %v416 = vmul.f32 %v406, %v214
        %v417 = vmul.f32 %v410, %v215
        %v418 = vmul.f32 %v407, %v214
        %v419 = vmul.f32 %v411, %v215
        %v420 = vadd.f32 %v388, %v412
        %v421 = vadd.f32 %v389, %v413
        %v422 = vadd.f32 %v390, %v414
        %v423 = vadd.f32 %v391, %v415
        %v424 = vadd.f32 %v392, %v416
        %v425 = vadd.f32 %v393, %v417
        %v426 = vadd.f32 %v394, %v418
        %v427 = vadd.f32 %v395, %v419
        %v428 = vmul.f32 %v420, 0.2505593
        %v429 = vmul.f32 %v421, 0.2505593
        %v430 = vmul.f32 %v422, 0.2505593
        %v431 = vmul.f32 %v423, 0.2505593
        %v432 = vmul.f32 %v424, 0.2505593
        %v433 = vmul.f32 %v425, 0.2505593
        %v434 = vmul.f32 %v426, 0.2505593
        %v435 = vmul.f32 %v427, 0.2505593
        %436 = vrot.lane.b32.xlu0 %v420, 1
        %v437 = vpop.permute.xlu0 %436
        %438 = vrot.lane.b32.xlu0 %v421, 1
        %v439 = vpop.permute.xlu0 %438
        %440 = vrot.lane.b32.xlu0 %v422, 1
        %v441 = vpop.permute.xlu0 %440
        %442 = vrot.lane.b32.xlu0 %v423, 1
        %v443 = vpop.permute.xlu0 %442
        %444 = vrot.lane.b32.xlu0 %v424, 1
        %v445 = vpop.permute.xlu0 %444
        %446 = vrot.lane.b32.xlu0 %v425, 1
        %v447 = vpop.permute.xlu0 %446
        %448 = vrot.lane.b32.xlu0 %v426, 1
        %v449 = vpop.permute.xlu0 %448
        %450 = vrot.lane.b32.xlu0 %v427, 1
        %v451 = vpop.permute.xlu0 %450
        %v452 = vperm.slane %v216, 0
        %v453 = vmul.f32 %v437, %v452
        %v454 = vmul.f32 %v439, %v452
        %v455 = vmul.f32 %v441, %v452
        %v456 = vmul.f32 %v443, %v452
        %v457 = vmul.f32 %v445, %v452
        %v458 = vmul.f32 %v447, %v452
        %v459 = vmul.f32 %v449, %v452
        %v460 = vmul.f32 %v451, %v452
        %v461 = vadd.f32 %v428, %v453
        %v462 = vadd.f32 %v429, %v454
        %v463 = vadd.f32 %v430, %v455
        %v464 = vadd.f32 %v431, %v456
        %v465 = vadd.f32 %v432, %v457
        %v466 = vadd.f32 %v433, %v458
        %v467 = vadd.f32 %v434, %v459
        %v468 = vadd.f32 %v435, %v460
        %469 = vrot.lane.b32.xlu0 %v420, 127
        %v470 = vpop.permute.xlu0 %469
        %471 = vrot.lane.b32.xlu0 %v421, 127
        %v472 = vpop.permute.xlu0 %471
        %473 = vrot.lane.b32.xlu0 %v422, 127
        %v474 = vpop.permute.xlu0 %473
        %475 = vrot.lane.b32.xlu0 %v423, 127
        %v476 = vpop.permute.xlu0 %475
        %477 = vrot.lane.b32.xlu0 %v424, 127
        %v478 = vpop.permute.xlu0 %477
        %479 = vrot.lane.b32.xlu0 %v425, 127
        %v480 = vpop.permute.xlu0 %479
        %481 = vrot.lane.b32.xlu0 %v426, 127
        %v482 = vpop.permute.xlu0 %481
        %483 = vrot.lane.b32.xlu0 %v427, 127
        %v484 = vpop.permute.xlu0 %483
        %v485 = vperm.slane %v217, 0
        %v486 = vmul.f32 %v470, %v485
        %v487 = vmul.f32 %v472, %v485
        %v488 = vmul.f32 %v474, %v485
        %v489 = vmul.f32 %v476, %v485
        %v490 = vmul.f32 %v478, %v485
        %v491 = vmul.f32 %v480, %v485
        %v492 = vmul.f32 %v482, %v485
        %v493 = vmul.f32 %v484, %v485
        %v494 = vadd.f32 %v461, %v486
        %v495 = vadd.f32 %v462, %v487
        %v496 = vadd.f32 %v463, %v488
        %v497 = vadd.f32 %v464, %v489
        %v498 = vadd.f32 %v465, %v490
        %v499 = vadd.f32 %v466, %v491
        %v500 = vadd.f32 %v467, %v492
        %v501 = vadd.f32 %v468, %v493
        %502 = vrot.lane.b32.xlu0 %v420, 2
        %v503 = vpop.permute.xlu0 %502
        %504 = vrot.lane.b32.xlu0 %v421, 2
        %v505 = vpop.permute.xlu0 %504
        %506 = vrot.lane.b32.xlu0 %v422, 2
        %v507 = vpop.permute.xlu0 %506
        %508 = vrot.lane.b32.xlu0 %v423, 2
        %v509 = vpop.permute.xlu0 %508
        %510 = vrot.lane.b32.xlu0 %v424, 2
        %v511 = vpop.permute.xlu0 %510
        %512 = vrot.lane.b32.xlu0 %v425, 2
        %v513 = vpop.permute.xlu0 %512
        %514 = vrot.lane.b32.xlu0 %v426, 2
        %v515 = vpop.permute.xlu0 %514
        %516 = vrot.lane.b32.xlu0 %v427, 2
        %v517 = vpop.permute.xlu0 %516
        %v518 = vperm.slane %v230, 0
        %v519 = vmul.f32 %v503, %v518
        %v520 = vmul.f32 %v505, %v518
        %v521 = vmul.f32 %v507, %v518
        %v522 = vmul.f32 %v509, %v518
        %v523 = vmul.f32 %v511, %v518
        %v524 = vmul.f32 %v513, %v518
        %v525 = vmul.f32 %v515, %v518
        %v526 = vmul.f32 %v517, %v518
        %v527 = vadd.f32 %v494, %v519
        %v528 = vadd.f32 %v495, %v520
        %v529 = vadd.f32 %v496, %v521
        %v530 = vadd.f32 %v497, %v522
        %v531 = vadd.f32 %v498, %v523
        %v532 = vadd.f32 %v499, %v524
        %v533 = vadd.f32 %v500, %v525
        %v534 = vadd.f32 %v501, %v526
        %535 = vrot.lane.b32.xlu0 %v420, 126
        %v536 = vpop.permute.xlu0 %535
        %537 = vrot.lane.b32.xlu0 %v421, 126
        %v538 = vpop.permute.xlu0 %537
        %539 = vrot.lane.b32.xlu0 %v422, 126
        %v540 = vpop.permute.xlu0 %539
        %541 = vrot.lane.b32.xlu0 %v423, 126
        %v542 = vpop.permute.xlu0 %541
        %543 = vrot.lane.b32.xlu0 %v424, 126
        %v544 = vpop.permute.xlu0 %543
        %545 = vrot.lane.b32.xlu0 %v425, 126
        %v546 = vpop.permute.xlu0 %545
        %547 = vrot.lane.b32.xlu0 %v426, 126
        %v548 = vpop.permute.xlu0 %547
        %549 = vrot.lane.b32.xlu0 %v427, 126
        %v550 = vpop.permute.xlu0 %549
        %v551 = vperm.slane %v239, 0
        %v552 = vmul.f32 %v536, %v551
        %v553 = vmul.f32 %v538, %v551
        %v554 = vmul.f32 %v540, %v551
        %v555 = vmul.f32 %v542, %v551
        %v556 = vmul.f32 %v544, %v551
        %v557 = vmul.f32 %v546, %v551
        %v558 = vmul.f32 %v548, %v551
        %v559 = vmul.f32 %v550, %v551
        %v560 = vadd.f32 %v527, %v552
        %v561 = vadd.f32 %v528, %v553
        %v562 = vadd.f32 %v529, %v554
        %v563 = vadd.f32 %v530, %v555
        %v564 = vadd.f32 %v531, %v556
        %v565 = vadd.f32 %v532, %v557
        %v566 = vadd.f32 %v533, %v558
        %v567 = vadd.f32 %v534, %v559
        %v568 = vmul.f32 %v560, 0.2505593
        %v569 = vmul.f32 %v561, 0.2505593
        %v570 = vmul.f32 %v562, 0.2505593
        %v571 = vmul.f32 %v563, 0.2505593
        %v572 = vmul.f32 %v564, 0.2505593
        %v573 = vmul.f32 %v565, 0.2505593
        %v574 = vmul.f32 %v566, 0.2505593
        %v575 = vmul.f32 %v567, 0.2505593
        %v576 = vrot.slane %v560, 7
        %v577 = vrot.slane %v562, 7
        %v578 = vrot.slane %v564, 7
        %v579 = vrot.slane %v566, 7
        %v580 = vrot.slane %v561, 7
        %v581 = vrot.slane %v563, 7
        %v582 = vrot.slane %v565, 7
        %v583 = vrot.slane %v567, 7
        %v584 = vsel %vm184, %v576, %v580
        %v585 = vsel %vm184, %v577, %v581
        %v586 = vsel %vm184, %v578, %v582
        %v587 = vsel %vm184, %v579, %v583
        %v588 = vsel %vm184, %v580, %v576
        %v589 = vsel %vm184, %v581, %v577
        %v590 = vsel %vm184, %v582, %v578
        %v591 = vsel %vm184, %v583, %v579
        %v592 = vmul.f32 %v588, %v218
        %v593 = vmul.f32 %v584, %v219
        %v594 = vmul.f32 %v589, %v218
        %v595 = vmul.f32 %v585, %v219
        %v596 = vmul.f32 %v590, %v218
        %v597 = vmul.f32 %v586, %v219
        %v598 = vmul.f32 %v591, %v218
        %v599 = vmul.f32 %v587, %v219
        %v600 = vadd.f32 %v568, %v592
        %v601 = vadd.f32 %v569, %v593
        %v602 = vadd.f32 %v570, %v594
        %v603 = vadd.f32 %v571, %v595
        %v604 = vadd.f32 %v572, %v596
        %v605 = vadd.f32 %v573, %v597
        %v606 = vadd.f32 %v574, %v598
        %v607 = vadd.f32 %v575, %v599
        %v608 = vrot.slane %v560, 1
        %v609 = vrot.slane %v562, 1
        %v610 = vrot.slane %v564, 1
        %v611 = vrot.slane %v566, 1
        %v612 = vrot.slane %v561, 1
        %v613 = vrot.slane %v563, 1
        %v614 = vrot.slane %v565, 1
        %v615 = vrot.slane %v567, 1
        %v616 = vsel %vm201, %v608, %v612
        %v617 = vsel %vm201, %v609, %v613
        %v618 = vsel %vm201, %v610, %v614
        %v619 = vsel %vm201, %v611, %v615
        %v620 = vsel %vm201, %v612, %v608
        %v621 = vsel %vm201, %v613, %v609
        %v622 = vsel %vm201, %v614, %v610
        %v623 = vsel %vm201, %v615, %v611
        %v624 = vmul.f32 %v616, %v220
        %v625 = vmul.f32 %v620, %v221
        %v626 = vmul.f32 %v617, %v220
        %v627 = vmul.f32 %v621, %v221
        %v628 = vmul.f32 %v618, %v220
        %v629 = vmul.f32 %v622, %v221
        %v630 = vmul.f32 %v619, %v220
        %v631 = vmul.f32 %v623, %v221
        %v632 = vadd.f32 %v600, %v624
        %v633 = vadd.f32 %v601, %v625
        %v634 = vadd.f32 %v602, %v626
        %v635 = vadd.f32 %v603, %v627
        %v636 = vadd.f32 %v604, %v628
        %v637 = vadd.f32 %v605, %v629
        %v638 = vadd.f32 %v606, %v630
        %v639 = vadd.f32 %v607, %v631
        %v640 = vrot.slane %v560, 6
        %v641 = vrot.slane %v562, 6
        %v642 = vrot.slane %v564, 6
        %v643 = vrot.slane %v566, 6
        %v644 = vrot.slane %v561, 6
        %v645 = vrot.slane %v563, 6
        %v646 = vrot.slane %v565, 6
        %v647 = vrot.slane %v567, 6
        %v648 = vsel %vm242, %v640, %v644
        %v649 = vsel %vm242, %v641, %v645
        %v650 = vsel %vm242, %v642, %v646
        %v651 = vsel %vm242, %v643, %v647
        %v652 = vsel %vm242, %v644, %v640
        %v653 = vsel %vm242, %v645, %v641
        %v654 = vsel %vm242, %v646, %v642
        %v655 = vsel %vm242, %v647, %v643
        %v656 = vmul.f32 %v652, %v255
        %v657 = vmul.f32 %v648, %v256
        %v658 = vmul.f32 %v653, %v255
        %v659 = vmul.f32 %v649, %v256
        %v660 = vmul.f32 %v654, %v255
        %v661 = vmul.f32 %v650, %v256
        %v662 = vmul.f32 %v655, %v255
        %v663 = vmul.f32 %v651, %v256
        %v664 = vadd.f32 %v632, %v656
        %v665 = vadd.f32 %v633, %v657
        %v666 = vadd.f32 %v634, %v658
        %v667 = vadd.f32 %v635, %v659
        %v668 = vadd.f32 %v636, %v660
        %v669 = vadd.f32 %v637, %v661
        %v670 = vadd.f32 %v638, %v662
        %v671 = vadd.f32 %v639, %v663
        %v672 = vrot.slane %v560, 2
        %v673 = vrot.slane %v562, 2
        %v674 = vrot.slane %v564, 2
        %v675 = vrot.slane %v566, 2
        %v676 = vrot.slane %v561, 2
        %v677 = vrot.slane %v563, 2
        %v678 = vrot.slane %v565, 2
        %v679 = vrot.slane %v567, 2
        %v680 = vsel %vm259, %v672, %v676
        %v681 = vsel %vm259, %v673, %v677
        %v682 = vsel %vm259, %v674, %v678
        %v683 = vsel %vm259, %v675, %v679
        %v684 = vsel %vm259, %v676, %v672
        %v685 = vsel %vm259, %v677, %v673
        %v686 = vsel %vm259, %v678, %v674
        %v687 = vsel %vm259, %v679, %v675
        %v688 = vmul.f32 %v680, %v272
        %v689 = vmul.f32 %v684, %v273
        %v690 = vmul.f32 %v681, %v272
        %v691 = vmul.f32 %v685, %v273
        %v692 = vmul.f32 %v682, %v272
        %v693 = vmul.f32 %v686, %v273
        %v694 = vmul.f32 %v683, %v272
        %v695 = vmul.f32 %v687, %v273
        %v696 = vadd.f32 %v664, %v688
        %v697 = vadd.f32 %v665, %v689
        %v698 = vadd.f32 %v666, %v690
        %v699 = vadd.f32 %v667, %v691
        %v700 = vadd.f32 %v668, %v692
        %v701 = vadd.f32 %v669, %v693
        %v702 = vadd.f32 %v670, %v694
        %v703 = vadd.f32 %v671, %v695
        %v704 = vsub.f32 %v274, %v696
        %v705 = vsub.f32 %v275, %v697
        %v706 = vsub.f32 %v276, %v698
        %v707 = vsub.f32 %v277, %v699
        %v708 = vsub.f32 %v278, %v700
        %v709 = vsub.f32 %v279, %v701
        %v710 = vsub.f32 %v280, %v702
        %v711 = vsub.f32 %v281, %v703
        %712 = vst [vmem:[%s155] sm:$0xff] %v704
        %713 = vst [vmem:[%s155 + $0x8] sm:$0xff] %v705
        %714 = vst [vmem:[%s155 + $0x10] sm:$0xff] %v706
        %715 = vst [vmem:[%s155 + $0x18] sm:$0xff] %v707
        %716 = vst [vmem:[%s155 + $0x20] sm:$0xff] %v708
        %717 = vst [vmem:[%s155 + $0x28] sm:$0xff] %v709
        %718 = vst [vmem:[%s155 + $0x30] sm:$0xff] %v710
        %719 = vst [vmem:[%s155 + $0x38] sm:$0xff] %v711
        %s720 = sand.u32 %s68, 1
        %s721 = scalar_lea.sflag [#allocation4], %s720
        %s722 = sand.u32 %s68, 1
        %s723 = smul.addr %s722, 64
        %s724 = scalar_lea.vmem [#allocation5], %s723
        // Predicated region
        $region29: #{tpu_custom_call.1} parent=23 // pred_check
          %p725 = pneg %p78
        $region30: #{tpu_custom_call.1} parent=23 // pred_check_branch
          %727 = sbr.rel (%p725) target = $region32
        $region31: #{tpu_custom_call.1} parent=23 // pred_region
          %s728 = smul.u32 4, %s23
          %730 = vsyncadd %s721, 0
          %s731 = smul.addr %s728, 2
          %s732 = smul.addr %s22, 8
          %s733 = sadd.s32 %s731, %s732
          %s734 = smul.addr %s733, 8
          %s735 = scalar_lea.hbm %s1, %s734
          %s736 = sshll.u32 %s724, 4
          %s737 = int_to_ptr.vmem [resolvable:$true] %s736
          %s738 = sshll.u32 %s735, 4
          %s739 = int_to_ptr.hbm [resolvable:$true] %s738
          %744 = dma.vmem_to_hbm [thread:$0]  %s737, 1024, %s739, %s721, 128, 128, 8
        $region32: #{tpu_custom_call.1} parent=23 // pred_fallthru
          _
      $region24: #{tpu_custom_call.1} parent=5 // pred_fallthru
        _
      %p745 = scmp.le.s32.totalorder 2, %s13
      // Predicated region
      $region33: #{tpu_custom_call.1} parent=5 // pred_check
        %p746 = pneg %p745
      $region34: #{tpu_custom_call.1} parent=5 // pred_check_branch
        %748 = sbr.rel (%p746) target = $region36
      $region35: #{tpu_custom_call.1} parent=5 // pred_region
        %s749 = ssub.s32 %s13, 2
        // Predicated region
        $region37: #{tpu_custom_call.1} parent=35 // pred_check
          %p750 = pneg %p84
        $region38: #{tpu_custom_call.1} parent=35 // pred_check_branch
          %752 = sbr.rel (%p750) target = $region40
        $region39: #{tpu_custom_call.1} parent=35 // pred_region
          %s753 = sand.u32 %s69, 1
          %s754 = scalar_lea.sflag [#allocation4], %s753
          %s755 = sand.u32 %s69, 1
          %s756 = smul.addr %s755, 64
          %s757 = scalar_lea.vmem [#allocation5], %s756
          %759 = dma.done %s754, 1024
        $region40: #{tpu_custom_call.1} parent=35 // pred_fallthru
          _
      $region36: #{tpu_custom_call.1} parent=5 // pred_fallthru
        _
    $region6: #{tpu_custom_call.1} parent=1 // loop_footer
      %s17 = sadd.s32 1, %s13
    $region7: #{tpu_custom_call.1} parent=1 // loop_footer_branch
      %12 = sbr.rel target = $region3
    $region8: #{tpu_custom_call.1} parent=1 // loop_exit
      _
    %760 = vsyncpa [#allocation3], 1
    %s761 = scalar_lea.sflag [#allocation3], 1
    %762 = vsyncpa %s761, 1
    %763 = vsyncpa [#allocation4], 1
    %s764 = scalar_lea.sflag [#allocation4], 1
    %765 = vsyncpa %s764, 1

</llo_original>
